<compile_context>
chip_gen: v7x
topology: tpu7x:2x2x1
jax: 0.10.0
libtpu: 0.0.40
codegen_flags: <defaults>
</compile_context>

<pallas_src>
import math
import functools

import jax
import jax.numpy as jnp
from jax import lax
from jax.experimental import pallas as pl
from jax.experimental.pallas import tpu as pltpu


# Headroom below v7x's 64 MiB physical VMEM; also raises v5e/v6e scoped default.
_VMEM_LIMIT = 48 * 1024 * 1024


def _pick_tile(dim, candidates):
    """Largest aligned candidate that divides `dim`, else the full dim."""
    for c in candidates:
        if dim % c == 0:
            return c
    return dim


# ---------------------------------------------------------------------------
# Tiled linear:  y = x @ W_t + b     (W_t already [Din, Dout])
# ---------------------------------------------------------------------------
def _linear_kernel(x_ref, w_ref, b_ref, o_ref, acc_ref):
    kk = pl.program_id(2)

    @pl.when(kk == 0)
    def _():
        acc_ref[...] = jnp.zeros_like(acc_ref)

    # Weight tile is pre-transposed -> contract last axis of x with first axis
    # of w; no in-kernel transpose.
    acc_ref[...] += jnp.dot(x_ref[...], w_ref[...],
                            preferred_element_type=jnp.float32)

    @pl.when(kk == pl.num_programs(2) - 1)
    def _():
        o_ref[...] = (acc_ref[...] + b_ref[...]).astype(o_ref.dtype)


def linear_2d(x, w_t, b):
    """x: [M, K], w_t: [K, N] (pre-transposed), b: [N] -> [M, N]."""
    M, K = x.shape
    N = w_t.shape[1]
    tm = _pick_tile(M, (256, 128))
    tn = _pick_tile(N, (256, 128))
    tk = _pick_tile(K, (512, 256, 128))
    b2 = b.reshape(1, N)
    return pl.pallas_call(
        _linear_kernel,
        out_shape=jax.ShapeDtypeStruct((M, N), x.dtype),
        grid_spec=pltpu.PrefetchScalarGridSpec(
            num_scalar_prefetch=0,
            grid=(M // tm, N // tn, K // tk),
            in_specs=[
                pl.BlockSpec((tm, tk), lambda i, j, k: (i, k)),
                pl.BlockSpec((tk, tn), lambda i, j, k: (k, j)),
                pl.BlockSpec((1, tn), lambda i, j, k: (0, j)),
            ],
            out_specs=pl.BlockSpec((tm, tn), lambda i, j, k: (i, j)),
            scratch_shapes=[pltpu.VMEM((tm, tn), jnp.float32)],
        ),
        compiler_params=pltpu.CompilerParams(
            dimension_semantics=("parallel", "parallel", "arbitrary"),
            vmem_limit_bytes=_VMEM_LIMIT,
        ),
    )(x, w_t, b2)


# ---------------------------------------------------------------------------
# Fused Q/K/V projection: one pallas_call, three activations, stacked weights
# ---------------------------------------------------------------------------
def _qkv_proj_kernel(q_ref, k_ref, v_ref, w_ref, b_ref, o_ref, acc_ref):
    kk = pl.program_id(2)

    @pl.when(kk == 0)
    def _():
        acc_ref[...] = jnp.zeros_like(acc_ref)

    acc_ref[0] += jnp.dot(q_ref[...], w_ref[0], preferred_element_type=jnp.float32)
    acc_ref[1] += jnp.dot(k_ref[...], w_ref[1], preferred_element_type=jnp.float32)
    acc_ref[2] += jnp.dot(v_ref[...], w_ref[2], preferred_element_type=jnp.float32)

    @pl.when(kk == pl.num_programs(2) - 1)
    def _():
        o_ref[...] = (acc_ref[...] + b_ref[...]).astype(o_ref.dtype)


def qkv_projection(query, key, value, w_qkv_t, b_qkv):
    """query/key/value: [B, L, D]; w_qkv_t: [3, D, D] (in, out); b_qkv: [3, D].

    Returns the projected slab [3, B*L, D] (q / k / v along the leading axis).
    """
    B, L, D = query.shape
    M = B * L
    q2d = query.reshape(M, D)
    k2d = key.reshape(M, D)
    v2d = value.reshape(M, D)
    tm = _pick_tile(M, (256, 128))
    tn = _pick_tile(D, (256, 128))
    tk = _pick_tile(D, (512, 256, 128))
    b3 = b_qkv.reshape(3, 1, D)
    return pl.pallas_call(
        _qkv_proj_kernel,
        out_shape=jax.ShapeDtypeStruct((3, M, D), query.dtype),
        grid_spec=pltpu.PrefetchScalarGridSpec(
            num_scalar_prefetch=0,
            grid=(M // tm, D // tn, D // tk),
            in_specs=[
                pl.BlockSpec((tm, tk), lambda i, j, k: (i, k)),        # query
                pl.BlockSpec((tm, tk), lambda i, j, k: (i, k)),        # key
                pl.BlockSpec((tm, tk), lambda i, j, k: (i, k)),        # value
                pl.BlockSpec((3, tk, tn), lambda i, j, k: (0, k, j)),  # W_qkv^T
                pl.BlockSpec((3, 1, tn), lambda i, j, k: (0, 0, j)),   # b_qkv
            ],
            out_specs=pl.BlockSpec((3, tm, tn), lambda i, j, k: (0, i, j)),
            scratch_shapes=[pltpu.VMEM((3, tm, tn), jnp.float32)],
        ),
        compiler_params=pltpu.CompilerParams(
            dimension_semantics=("parallel", "parallel", "arbitrary"),
            vmem_limit_bytes=_VMEM_LIMIT,
        ),
    )(q2d, k2d, v2d, w_qkv_t, b3)


# ---------------------------------------------------------------------------
# Attention: per-batch grid step, all heads per step, lane-dense output
# ---------------------------------------------------------------------------
def _attention_body(qkv_ref, o_ref, p_ref, h, d_k, scale):
    # qkv_ref block: (3, 1, L, d_model) for one batch element.
    q = qkv_ref[0, 0] * scale          # fold 1/sqrt(d_k) into q: O(L*d_model)
    k = qkv_ref[1, 0]
    v = qkv_ref[2, 0]

    ctx_parts = []
    for head in range(h):              # unrolled; all heads in one grid step
        lo = head * d_k
        qh = q[:, lo:lo + d_k]
        kh = k[:, lo:lo + d_k]
        vh = v[:, lo:lo + d_k]
        # Contract d_k of both operands directly -- no k.T XLU transpose.
        s = lax.dot_general(qh, kh, (((1,), (1,)), ((), ())),
                            preferred_element_type=jnp.float32)        # (L, L)
        # TODO(synk): padding mask (score.masked_fill(mask == 0, -1e9)) not
        # wired in; this path only covers mask=None.
        m = jnp.max(s, axis=-1, keepdims=True)
        e = jnp.exp(s - m)
        denom = jnp.sum(e, axis=-1, keepdims=True)
        p = e * pl.reciprocal(denom, approx=True)       # softmax(dim=-1), EUP divide
        # TODO(synk): nn.Dropout(p=0.1) on p_attn is identity in eval mode;
        # training-time dropout is not reproduced.
        if p_ref is not None:
            p_ref[0, head] = p.astype(p_ref.dtype)
        ctx_parts.append(jnp.dot(p.astype(vh.dtype), vh,
                                 preferred_element_type=jnp.float32))  # (L, d_k)

    # Lane-dense (L, d_model) context written straight back: no [B,h,L,d_k]
    # transpose round trip through HBM, no masked d_k-wide partial stores.
    o_ref[0] = jnp.concatenate(ctx_parts, axis=-1).astype(o_ref.dtype)


def _attention_kernel(qkv_ref, o_ref, *, h, d_k, scale):
    _attention_body(qkv_ref, o_ref, None, h, d_k, scale)


def _attention_kernel_with_p(qkv_ref, o_ref, p_ref, *, h, d_k, scale):
    _attention_body(qkv_ref, o_ref, p_ref, h, d_k, scale)


def fused_attention(qkv, h, return_attn=False):
    """qkv: [3, B, L, d_model] -> context [B, L, d_model] (+ optional attn)."""
    # TODO(synk): for long sequences switch to flash-style KV tiling (online
    # softmax, O(L*tile) VMEM) instead of materializing the full (L, L) scores.
    _, B, L, d_model = qkv.shape
    d_k = d_model // h
    scale = 1.0 / math.sqrt(d_k)

    in_specs = [pl.BlockSpec((3, 1, L, d_model), lambda b: (0, b, 0, 0))]
    if return_attn:
        kern = functools.partial(_attention_kernel_with_p, h=h, d_k=d_k, scale=scale)
        out_shape = (jax.ShapeDtypeStruct((B, L, d_model), qkv.dtype),
                     jax.ShapeDtypeStruct((B, h, L, L), qkv.dtype))
        out_specs = (pl.BlockSpec((1, L, d_model), lambda b: (b, 0, 0)),
                     pl.BlockSpec((1, h, L, L), lambda b: (b, 0, 0, 0)))
    else:
        kern = functools.partial(_attention_kernel, h=h, d_k=d_k, scale=scale)
        out_shape = jax.ShapeDtypeStruct((B, L, d_model), qkv.dtype)
        out_specs = pl.BlockSpec((1, L, d_model), lambda b: (b, 0, 0))

    return pl.pallas_call(
        kern,
        out_shape=out_shape,
        grid_spec=pltpu.PrefetchScalarGridSpec(
            num_scalar_prefetch=0,
            grid=(B,),
            in_specs=in_specs,
            out_specs=out_specs,
        ),
        compiler_params=pltpu.CompilerParams(
            dimension_semantics=("parallel",),
            vmem_limit_bytes=_VMEM_LIMIT,
        ),
    )(qkv)


# ---------------------------------------------------------------------------
# MultiHeadAttention forward
# ---------------------------------------------------------------------------
def multi_head_attention(params, query, key, value, h, return_attn=False):
    """Mirrors MultiHeadAttention.forward (eval mode, mask=None)."""
    B, L, d_model = query.shape
    assert d_model % h == 0

    qkv = qkv_projection(query, key, value, params["w_qkv_t"], params["b_qkv"])
    qkv = qkv.reshape(3, B, L, d_model)          # free reshape, no transpose

    if return_attn:
        ctx, attn = fused_attention(qkv, h, return_attn=True)
    else:
        ctx = fused_attention(qkv, h, return_attn=False)
        attn = None

    out = linear_2d(ctx.reshape(B * L, d_model), params["w_o_t"], params["b_o"])
    out = out.reshape(B, L, d_model)
    return (out, attn) if return_attn else out


# ---------------------------------------------------------------------------
# Parameters (PyTorch nn.Linear convention) + one-time layout prep
# ---------------------------------------------------------------------------
def init_params(key, d_model):
    """W: [out, in], b: [out]; uniform(-1/sqrt(in), 1/sqrt(in)) like nn.Linear."""
    bound = 1.0 / math.sqrt(d_model)
    ws, bs = [], []
    for _ in range(4):
        kw, kb, key = jax.random.split(key, 3)
        ws.append(jax.random.uniform(kw, (d_model, d_model), jnp.float32,
                                     minval=-bound, maxval=bound))
        bs.append(jax.random.uniform(kb, (d_model,), jnp.float32,
                                     minval=-bound, maxval=bound))
    return {"w": ws, "b": bs}


def prepare_params(raw):
    """One-time prep: transpose to [in, out] and stack Q/K/V weights so the
    kernels never transpose on the MXU path."""
    w_qkv_t = jnp.stack([raw["w"][i].T for i in range(3)], axis=0)   # [3, D, D]
    b_qkv = jnp.stack([raw["b"][i] for i in range(3)], axis=0)       # [3, D]
    return {
        "w_qkv_t": w_qkv_t,
        "b_qkv": b_qkv,
        "w_o_t": raw["w"][3].T,                                      # [D, D]
        "b_o": raw["b"][3],
    }


def multi_head_attention_ref(raw, query, key, value, h):
    """Pure-JAX reference (matches the PyTorch module, eval mode)."""
    B, L, d_model = query.shape
    d_k = d_model // h

    def proj(idx, x):
        y = x @ raw["w"][idx].T + raw["b"][idx]
        return y.reshape(B, L, h, d_k).transpose(0, 2, 1, 3)

    q, k, v = proj(0, query), proj(1, key), proj(2, value)
    score = jnp.einsum("bhqd,bhkd->bhqk", q, k) / math.sqrt(d_k)
    p = jax.nn.softmax(score, axis=-1)
    x = jnp.einsum("bhqk,bhkd->bhqd", p, v)
    x = x.transpose(0, 2, 1, 3).reshape(B, L, d_model)
    return x @ raw["w"][3].T + raw["b"][3], p


if __name__ == "__main__":
    B, L, d_model, h = 2, 8, 32, 4

    root = jax.random.PRNGKey(0)
    kq, kk, kv, kp = jax.random.split(root, 4)
    query = jax.random.normal(kq, (B, L, d_model), jnp.float32)
    key_x = jax.random.normal(kk, (B, L, d_model), jnp.float32)
    value = jax.random.normal(kv, (B, L, d_model), jnp.float32)

    raw = init_params(kp, d_model)
    params = prepare_params(raw)

    # Primary path (matches module.forward return: output only, attn dropped).
    out = multi_head_attention(params, query, key_x, value, h)
    out = jax.block_until_ready(out)

    # Optional path that also materializes the attention map (self.attn).
    out2, attn = multi_head_attention(params, query, key_x, value, h,
                                      return_attn=True)
    out2 = jax.block_until_ready(out2)
    attn = jax.block_until_ready(attn)

    ref_out, ref_attn = multi_head_attention_ref(raw, query, key_x, value, h)

    assert out.shape == (B, L, d_model)
    assert attn.shape == (B, h, L, L)
    # Tolerance accounts for the approx (EUP) reciprocal in the softmax.
    assert jnp.allclose(out, ref_out, atol=5e-3, rtol=5e-3), "out mismatch"
    assert jnp.allclose(out2, ref_out, atol=5e-3, rtol=5e-3), "out2 mismatch"
    assert jnp.allclose(attn, ref_attn, atol=5e-3, rtol=5e-3), "attn mismatch"

    print("KERNEL_OK")
</pallas_src>

<mosaic_0001>
module attributes {stable_mosaic.version = 11 : i64} {
  func.func @_qkv_proj_kernel(%arg0: i32, %arg1: i32, %arg2: i32, %arg3: memref<16x32xf32, #tpu.memory_space<vmem>>, %arg4: memref<16x32xf32, #tpu.memory_space<vmem>>, %arg5: memref<16x32xf32, #tpu.memory_space<vmem>>, %arg6: memref<3x32x32xf32, #tpu.memory_space<vmem>>, %arg7: memref<3x1x32xf32, #tpu.memory_space<vmem>>, %arg8: memref<3x16x32xf32, #tpu.memory_space<vmem>>, %arg9: memref<3x16x32xf32, #tpu.memory_space<vmem>>) attributes {dimension_semantics = [#tpu.dimension_semantics<parallel>, #tpu.dimension_semantics<parallel>, #tpu.dimension_semantics<arbitrary>], iteration_bounds = array<i64: 1, 1, 1>, scalar_prefetch = 0 : i64, scratch_operands = 1 : i64, tpu.core_type = #tpu.core_type<tc>, window_params = [{transform_indices = @transform_0, window_bounds = array<i64: 16, 32>}, {transform_indices = @transform_1, window_bounds = array<i64: 16, 32>}, {transform_indices = @transform_2, window_bounds = array<i64: 16, 32>}, {transform_indices = @transform_3, window_bounds = array<i64: 3, 32, 32>}, {transform_indices = @transform_4, window_bounds = array<i64: 3, 1, 32>}, {transform_indices = @transform_5, window_bounds = array<i64: 3, 16, 32>}]} {
    %c0_i32 = arith.constant 0 : i32
    %0 = arith.cmpi eq, %arg2, %c0_i32 : i32
    %1 = arith.extui %0 : i1 to i32
    %c0_i32_0 = arith.constant 0 : i32
    %2 = arith.cmpi ne, %1, %c0_i32_0 : i32
    scf.if %2 {
      %cst_35 = arith.constant 0.000000e+00 : f32
      %36 = vector.broadcast %cst_35 : f32 to vector<3x16x32xf32>
      %c0_36 = arith.constant 0 : index
      %c0_37 = arith.constant 0 : index
      %c0_38 = arith.constant 0 : index
      %37 = vector.load %arg9[%c0_36, %c0_37, %c0_38] : memref<3x16x32xf32, #tpu.memory_space<vmem>>, vector<3x16x32xf32>
      tpu.vector_store %arg9[%c0_36, %c0_37, %c0_38], %36 {strides = array<i32>} : memref<3x16x32xf32, #tpu.memory_space<vmem>>, vector<3x16x32xf32>,
    } else {
    }
    %c0 = arith.constant 0 : index
    %c0_1 = arith.constant 0 : index
    %c0_2 = arith.constant 0 : index
    %3 = vector.load %arg9[%c0, %c0_1, %c0_2] : memref<3x16x32xf32, #tpu.memory_space<vmem>>, vector<1x16x32xf32>
    %4 = vector.shape_cast %3 : vector<1x16x32xf32> to vector<16x32xf32>
    %c0_3 = arith.constant 0 : index
    %c0_4 = arith.constant 0 : index
    %5 = vector.load %arg3[%c0_3, %c0_4] : memref<16x32xf32, #tpu.memory_space<vmem>>, vector<16x32xf32>
    %c0_5 = arith.constant 0 : index
    %c0_6 = arith.constant 0 : index
    %c0_7 = arith.constant 0 : index
    %6 = vector.load %arg6[%c0_5, %c0_6, %c0_7] : memref<3x32x32xf32, #tpu.memory_space<vmem>>, vector<1x32x32xf32>
    %7 = vector.shape_cast %6 : vector<1x32x32xf32> to vector<32x32xf32>
    %cst = arith.constant dense<0.000000e+00> : vector<16x32xf32>
    %8 = tpu.matmul %5, %7, %cst {dimension_numbers = #tpu.dot_dimension_numbers<[1], [0], [0], [1], [0, 0, 1, 1], [], []>} : vector<16x32xf32>, vector<32x32xf32>, vector<16x32xf32> -> vector<16x32xf32>
    %9 = arith.addf %4, %8 : vector<16x32xf32>
    %c0_8 = arith.constant 0 : index
    %c0_9 = arith.constant 0 : index
    %c0_10 = arith.constant 0 : index
    %10 = vector.load %arg9[%c0_8, %c0_9, %c0_10] : memref<3x16x32xf32, #tpu.memory_space<vmem>>, vector<1x16x32xf32>
    %11 = vector.shape_cast %10 : vector<1x16x32xf32> to vector<16x32xf32>
    %12 = vector.shape_cast %9 : vector<16x32xf32> to vector<1x16x32xf32>
    tpu.vector_store %arg9[%c0_8, %c0_9, %c0_10], %12 {strides = array<i32>} : memref<3x16x32xf32, #tpu.memory_space<vmem>>, vector<1x16x32xf32>,
    %c1 = arith.constant 1 : index
    %c0_11 = arith.constant 0 : index
    %c0_12 = arith.constant 0 : index
    %13 = vector.load %arg9[%c1, %c0_11, %c0_12] : memref<3x16x32xf32, #tpu.memory_space<vmem>>, vector<1x16x32xf32>
    %14 = vector.shape_cast %13 : vector<1x16x32xf32> to vector<16x32xf32>
    %c0_13 = arith.constant 0 : index
    %c0_14 = arith.constant 0 : index
    %15 = vector.load %arg4[%c0_13, %c0_14] : memref<16x32xf32, #tpu.memory_space<vmem>>, vector<16x32xf32>
    %c1_15 = arith.constant 1 : index
    %c0_16 = arith.constant 0 : index
    %c0_17 = arith.constant 0 : index
    %16 = vector.load %arg6[%c1_15, %c0_16, %c0_17] : memref<3x32x32xf32, #tpu.memory_space<vmem>>, vector<1x32x32xf32>
    %17 = vector.shape_cast %16 : vector<1x32x32xf32> to vector<32x32xf32>
    %cst_18 = arith.constant dense<0.000000e+00> : vector<16x32xf32>
    %18 = tpu.matmul %15, %17, %cst_18 {dimension_numbers = #tpu.dot_dimension_numbers<[1], [0], [0], [1], [0, 0, 1, 1], [], []>} : vector<16x32xf32>, vector<32x32xf32>, vector<16x32xf32> -> vector<16x32xf32>
    %19 = arith.addf %14, %18 : vector<16x32xf32>
    %c1_19 = arith.constant 1 : index
    %c0_20 = arith.constant 0 : index
    %c0_21 = arith.constant 0 : index
    %20 = vector.load %arg9[%c1_19, %c0_20, %c0_21] : memref<3x16x32xf32, #tpu.memory_space<vmem>>, vector<1x16x32xf32>
    %21 = vector.shape_cast %20 : vector<1x16x32xf32> to vector<16x32xf32>
    %22 = vector.shape_cast %19 : vector<16x32xf32> to vector<1x16x32xf32>
    tpu.vector_store %arg9[%c1_19, %c0_20, %c0_21], %22 {strides = array<i32>} : memref<3x16x32xf32, #tpu.memory_space<vmem>>, vector<1x16x32xf32>,
    %c2 = arith.constant 2 : index
    %c0_22 = arith.constant 0 : index
    %c0_23 = arith.constant 0 : index
    %23 = vector.load %arg9[%c2, %c0_22, %c0_23] : memref<3x16x32xf32, #tpu.memory_space<vmem>>, vector<1x16x32xf32>
    %24 = vector.shape_cast %23 : vector<1x16x32xf32> to vector<16x32xf32>
    %c0_24 = arith.constant 0 : index
    %c0_25 = arith.constant 0 : index
    %25 = vector.load %arg5[%c0_24, %c0_25] : memref<16x32xf32, #tpu.memory_space<vmem>>, vector<16x32xf32>
    %c2_26 = arith.constant 2 : index
    %c0_27 = arith.constant 0 : index
    %c0_28 = arith.constant 0 : index
    %26 = vector.load %arg6[%c2_26, %c0_27, %c0_28] : memref<3x32x32xf32, #tpu.memory_space<vmem>>, vector<1x32x32xf32>
    %27 = vector.shape_cast %26 : vector<1x32x32xf32> to vector<32x32xf32>
    %cst_29 = arith.constant dense<0.000000e+00> : vector<16x32xf32>
    %28 = tpu.matmul %25, %27, %cst_29 {dimension_numbers = #tpu.dot_dimension_numbers<[1], [0], [0], [1], [0, 0, 1, 1], [], []>} : vector<16x32xf32>, vector<32x32xf32>, vector<16x32xf32> -> vector<16x32xf32>
    %29 = arith.addf %24, %28 : vector<16x32xf32>
    %c2_30 = arith.constant 2 : index
    %c0_31 = arith.constant 0 : index
    %c0_32 = arith.constant 0 : index
    %30 = vector.load %arg9[%c2_30, %c0_31, %c0_32] : memref<3x16x32xf32, #tpu.memory_space<vmem>>, vector<1x16x32xf32>
    %31 = vector.shape_cast %30 : vector<1x16x32xf32> to vector<16x32xf32>
    %32 = vector.shape_cast %29 : vector<16x32xf32> to vector<1x16x32xf32>
    tpu.vector_store %arg9[%c2_30, %c0_31, %c0_32], %32 {strides = array<i32>} : memref<3x16x32xf32, #tpu.memory_space<vmem>>, vector<1x16x32xf32>,
    %c0_i32_33 = arith.constant 0 : i32
    %33 = arith.cmpi eq, %arg2, %c0_i32_33 : i32
    %34 = arith.extui %33 : i1 to i32
    %c0_i32_34 = arith.constant 0 : i32
    %35 = arith.cmpi ne, %34, %c0_i32_34 : i32
    scf.if %35 {
      %c0_35 = arith.constant 0 : index
      %c0_36 = arith.constant 0 : index
      %c0_37 = arith.constant 0 : index
      %36 = vector.load %arg9[%c0_35, %c0_36, %c0_37] : memref<3x16x32xf32, #tpu.memory_space<vmem>>, vector<3x16x32xf32>
      %c0_38 = arith.constant 0 : index
      %c0_39 = arith.constant 0 : index
      %c0_40 = arith.constant 0 : index
      %37 = vector.load %arg7[%c0_38, %c0_39, %c0_40] : memref<3x1x32xf32, #tpu.memory_space<vmem>>, vector<3x1x32xf32>
      %38 = vector.broadcast %37 : vector<3x1x32xf32> to vector<3x16x32xf32>
      %39 = arith.addf %36, %38 : vector<3x16x32xf32>
      %c0_41 = arith.constant 0 : index
      %c0_42 = arith.constant 0 : index
      %c0_43 = arith.constant 0 : index
      %40 = vector.load %arg8[%c0_41, %c0_42, %c0_43] : memref<3x16x32xf32, #tpu.memory_space<vmem>>, vector<3x16x32xf32>
      tpu.vector_store %arg8[%c0_41, %c0_42, %c0_43], %39 {strides = array<i32>} : memref<3x16x32xf32, #tpu.memory_space<vmem>>, vector<3x16x32xf32>,
    } else {
    }
    return
  }
  func.func @transform_0(%arg0: i32, %arg1: i32, %arg2: i32) -> (i32, i32) {
    %c0_i32 = arith.constant 0 : i32
    return %arg0, %arg2 : i32, i32
  }
  func.func @transform_1(%arg0: i32, %arg1: i32, %arg2: i32) -> (i32, i32) {
    %c0_i32 = arith.constant 0 : i32
    return %arg0, %arg2 : i32, i32
  }
  func.func @transform_2(%arg0: i32, %arg1: i32, %arg2: i32) -> (i32, i32) {
    %c0_i32 = arith.constant 0 : i32
    return %arg0, %arg2 : i32, i32
  }
  func.func @transform_3(%arg0: i32, %arg1: i32, %arg2: i32) -> (i32, i32, i32) {
    %c0_i32 = arith.constant 0 : i32
    %c0_i32_0 = arith.constant 0 : i32
    return %c0_i32, %arg2, %arg1 : i32, i32, i32
  }
  func.func @transform_4(%arg0: i32, %arg1: i32, %arg2: i32) -> (i32, i32, i32) {
    %c0_i32 = arith.constant 0 : i32
    %c0_i32_0 = arith.constant 0 : i32
    %c0_i32_1 = arith.constant 0 : i32
    return %c0_i32, %c0_i32_0, %arg1 : i32, i32, i32
  }
  func.func @transform_5(%arg0: i32, %arg1: i32, %arg2: i32) -> (i32, i32, i32) {
    %c0_i32 = arith.constant 0 : i32
    %c0_i32_0 = arith.constant 0 : i32
    return %c0_i32, %arg0, %arg1 : i32, i32, i32
  }
}

</mosaic_0001>

<llo_original>
// kernel: tpu_custom_call.1
$region0: #{tpu_custom_call.1}
  #allocation0 [shape = 'u32[]', space=smem, size = 0x4, offset = 0x4, fixed_abs, tag = 'smem constant byte address 0x4 - core index']
  #allocation1 [shape = 'u32[144,128]{1,0:T(1,128)}', space=vmem, size = 0x12000, scoped, tag = 'internal scratch']
  #allocation2 [shape = 'f32[3,16,32]{2,1,0:T(8,128)}', space=vmem, size = 0x6000, scoped, tag = 'scratch operand']
  %s0 = inlined_call_operand.hbm [shape: f32[16,32], index: 0, kind: input, shape index: {}]
  %s1 = inlined_call_operand.hbm [shape: f32[16,32], index: 1, kind: input, shape index: {}]
  %s2 = inlined_call_operand.hbm [shape: f32[16,32], index: 2, kind: input, shape index: {}]
  %s3 = inlined_call_operand.hbm [shape: f32[3,32,32], index: 3, kind: input, shape index: {}]
  %s4 = inlined_call_operand.vmem [shape: f32[3,1,32], index: 4, kind: input, shape index: {}]
  %s5 = inlined_call_operand.hbm [shape: f32[3,16,32], index: 5, kind: output, shape index: {}]
  %s6 = sld [smem:[#allocation0]]
  $region54: #{tpu_custom_call.1} parent=0
    _
  %s8 = ssub.s32 1, %s6
  %s9 = scalar_select 0, %s8, %s6
  $region1: #{tpu_custom_call.1} parent=0
    #allocation3 [shape = 'u8[8192]{0}', space=vmem, size = 0x2000, scoped, tag = 'input window, operand 0, single buffered']
    #allocation4 [shape = 's32[1]{0}', space=sflag, size = 0x4, scoped, tag = 'scoped memory for tpu_custom_call.1']
    #allocation5 [shape = 's32[1]{0}', space=sflag, size = 0x4, scoped, tag = 'scoped memory for tpu_custom_call.1']
    #allocation6 [shape = 'u8[8192]{0}', space=vmem, size = 0x2000, scoped, tag = 'input window, operand 1, single buffered']
    #allocation7 [shape = 's32[1]{0}', space=sflag, size = 0x4, scoped, tag = 'scoped memory for tpu_custom_call.1']
    #allocation8 [shape = 'u8[8192]{0}', space=vmem, size = 0x2000, scoped, tag = 'input window, operand 2, single buffered']
    #allocation9 [shape = 'u8[49152]{0}', space=vmem, size = 0xc000, scoped, tag = 'input window, operand 3, single buffered']
    #allocation10 [shape = 's32[1]{0}', space=sflag, size = 0x4, scoped, tag = 'scoped memory for tpu_custom_call.1']
    #allocation11 [shape = 'u8[24576]{0}', space=vmem, size = 0x6000, scoped, tag = 'output window, operand 0, single buffered']
    %10 = vsyncpa [#allocation4], 0
    %11 = vsyncpa [#allocation7], 0
    %12 = vsyncpa [#allocation10], 0
    %13 = vsyncpa [#allocation5], 0
    // Predicated region
    $region2: #{tpu_custom_call.1} parent=1 // pred_check
      _
    $region3: #{tpu_custom_call.1} parent=1 // pred_check_branch
      %15 = sbr.rel (0) target = $region5
    $region4: #{tpu_custom_call.1} parent=1 // pred_region
      %s17 = ssub.s32 256, 256
      %18 = vsyncadd [#allocation4], %s17
      %s19 = sshll.u32 [#allocation3], 4
      %s20 = int_to_ptr.vmem [resolvable:$true] %s19
      %25 = dma.hbm_to_vmem [thread:$0]  %s0, 256, %s20, [#allocation4], 128, 128, 8
    $region5: #{tpu_custom_call.1} parent=1 // pred_fallthru
      _
    // Predicated region
    $region6: #{tpu_custom_call.1} parent=1 // pred_check
      _
    $region7: #{tpu_custom_call.1} parent=1 // pred_check_branch
      %27 = sbr.rel (0) target = $region9
    $region8: #{tpu_custom_call.1} parent=1 // pred_region
      %s29 = ssub.s32 256, 256
      %30 = vsyncadd [#allocation7], %s29
      %s31 = sshll.u32 [#allocation6], 4
      %s32 = int_to_ptr.vmem [resolvable:$true] %s31
      %37 = dma.hbm_to_vmem [thread:$0]  %s1, 256, %s32, [#allocation7], 128, 128, 8
    $region9: #{tpu_custom_call.1} parent=1 // pred_fallthru
      _
    // Predicated region
    $region10: #{tpu_custom_call.1} parent=1 // pred_check
      _
    $region11: #{tpu_custom_call.1} parent=1 // pred_check_branch
      %39 = sbr.rel (0) target = $region13
    $region12: #{tpu_custom_call.1} parent=1 // pred_region
      %s41 = ssub.s32 256, 256
      %42 = vsyncadd [#allocation7], %s41
      %s43 = sshll.u32 [#allocation8], 4
      %s44 = int_to_ptr.vmem [resolvable:$true] %s43
      %49 = dma.hbm_to_vmem [thread:$0]  %s2, 256, %s44, [#allocation7], 128, 128, 8
    $region13: #{tpu_custom_call.1} parent=1 // pred_fallthru
      _
    // Predicated region
    $region14: #{tpu_custom_call.1} parent=1 // pred_check
      _
    $region15: #{tpu_custom_call.1} parent=1 // pred_check_branch
      %51 = sbr.rel (0) target = $region17
    $region16: #{tpu_custom_call.1} parent=1 // pred_region
      %s53 = ssub.s32 1536, 1536
      %54 = vsyncadd [#allocation10], %s53
      %s55 = sshll.u32 [#allocation9], 4
      %s56 = int_to_ptr.vmem [resolvable:$true] %s55
      %61 = dma.hbm_to_vmem [thread:$0]  %s3, 1536, %s56, [#allocation10], 128, 128, 8
    $region17: #{tpu_custom_call.1} parent=1 // pred_fallthru
      _
    // Predicated region
    $region18: #{tpu_custom_call.1} parent=1 // pred_check
      _
    $region19: #{tpu_custom_call.1} parent=1 // pred_check_branch
      %63 = sbr.rel (0) target = $region21
    $region20: #{tpu_custom_call.1} parent=1 // pred_region
      _
    $region21: #{tpu_custom_call.1} parent=1 // pred_fallthru
      _
    // Predicated region
    $region22: #{tpu_custom_call.1} parent=1 // pred_check
      _
    $region23: #{tpu_custom_call.1} parent=1 // pred_check_branch
      %65 = sbr.rel (0) target = $region25
    $region24: #{tpu_custom_call.1} parent=1 // pred_region
      %66 = dma.done [#allocation4], 256
    $region25: #{tpu_custom_call.1} parent=1 // pred_fallthru
      _
    // Predicated region
    $region26: #{tpu_custom_call.1} parent=1 // pred_check
      _
    $region27: #{tpu_custom_call.1} parent=1 // pred_check_branch
      %68 = sbr.rel (0) target = $region29
    $region28: #{tpu_custom_call.1} parent=1 // pred_region
      %69 = dma.done [#allocation7], 256
    $region29: #{tpu_custom_call.1} parent=1 // pred_fallthru
      _
    // Predicated region
    $region30: #{tpu_custom_call.1} parent=1 // pred_check
      _
    $region31: #{tpu_custom_call.1} parent=1 // pred_check_branch
      %71 = sbr.rel (0) target = $region33
    $region32: #{tpu_custom_call.1} parent=1 // pred_region
      %72 = dma.done [#allocation7], 256
    $region33: #{tpu_custom_call.1} parent=1 // pred_fallthru
      _
    // Predicated region
    $region34: #{tpu_custom_call.1} parent=1 // pred_check
      _
    $region35: #{tpu_custom_call.1} parent=1 // pred_check_branch
      %74 = sbr.rel (0) target = $region37
    $region36: #{tpu_custom_call.1} parent=1 // pred_region
      %75 = dma.done [#allocation10], 1536
    $region37: #{tpu_custom_call.1} parent=1 // pred_fallthru
      _
    %p76 = scmp.eq.s32.totalorder 0, 0
    // Predicated region
    $region38: #{tpu_custom_call.1} parent=1 // pred_check
      %p77 = pneg %p76
    $region39: #{tpu_custom_call.1} parent=1 // pred_check_branch
      %79 = sbr.rel (%p77) target = $region41
    $region40: #{tpu_custom_call.1} parent=1 // pred_region
      %vm80 = vcmask 261120
      %81 = vst.msk [vmem:[#allocation2] sm:$0xff] %vm80, 0.0
      %82 = vst.msk [vmem:[#allocation2 + $0x8] sm:$0xff] %vm80, 0.0
      %83 = vst.msk [vmem:[#allocation2 + $0x10] sm:$0xff] %vm80, 0.0
      %84 = vst.msk [vmem:[#allocation2 + $0x18] sm:$0xff] %vm80, 0.0
      %85 = vst.msk [vmem:[#allocation2 + $0x20] sm:$0xff] %vm80, 0.0
      %86 = vst.msk [vmem:[#allocation2 + $0x28] sm:$0xff] %vm80, 0.0
    $region41: #{tpu_custom_call.1} parent=1 // pred_fallthru
      _
    %v87 = vld [vmem:[#allocation2] sm:$0xff]
    %v88 = vld [vmem:[#allocation2 + $0x8] sm:$0xff]
    %v89 = vld [vmem:[#allocation3] sm:$0xff]
    %v90 = vld [vmem:[#allocation3 + $0x8] sm:$0xff]
    %v91 = vld [vmem:[#allocation9] sm:$0xff]
    %v92 = vld [vmem:[#allocation9 + $0x8] sm:$0xff]
    %v93 = vld [vmem:[#allocation9 + $0x10] sm:$0xff]
    %v94 = vld [vmem:[#allocation9 + $0x18] sm:$0xff]
    %vm95 = vcmask 261120
    %v97 = vsel %vm95, %v89, 0
    %v100 = vsel %vm95, %v90, 0
    %102 = vmatprep.subr.mxu0 0.0
    %103 = vmatpush1.msra.mxu0 %v91
    %104 = vmatprep.subr.mxu0 0.0
    %105 = vmatpush1.msra.mxu0 %v92
    %106 = vmatprep.subr.mxu0 0.0
    %107 = vmatpush1.msra.mxu0 %v93
    %108 = vmatprep.subr.mxu0 0.0
    %109 = vmatpush1.msra.mxu0 %v94
    %110 = vmatprep.subr.mxu0 0.0
    %111 = vmatpush1.msra.mxu0 0.0
    %112 = vmatprep.subr.mxu0 0.0
    %113 = vmatpush1.msra.mxu0 0.0
    %114 = vmatprep.subr.mxu0 0.0
    %115 = vmatpush1.msra.mxu0 0.0
    %116 = vmatprep.subr.mxu0 0.0
    %117 = vmatpush1.msra.mxu0 0.0
    %118 = vmatprep.subr.mxu0 0.0
    %119 = vmatpush1.msra.mxu0 0.0
    %120 = vmatprep.subr.mxu0 0.0
    %121 = vmatpush1.msra.mxu0 0.0
    %122 = vmatprep.subr.mxu0 0.0
    %123 = vmatpush1.msra.mxu0 0.0
    %124 = vmatprep.subr.mxu0 0.0
    %125 = vmatpush1.msra.mxu0 0.0
    %126 = vmatprep.subr.mxu0 0.0
    %127 = vmatpush1.msra.mxu0 0.0
    %128 = vmatprep.subr.mxu0 0.0
    %129 = vmatpush1.msra.mxu0 0.0
    %130 = vmatprep.subr.mxu0 0.0
    %131 = vmatpush1.msra.mxu0 0.0
    %132 = vmatprep.subr.mxu0 0.0
    %133 = vmatpush1.msra.mxu0 0.0
    %134 = vmatprep.subr.mxu0 0.0
    %135 = vmatpush1.msra.mxu0 0.0
    %136 = vmatprep.subr.mxu0 0.0
    %137 = vmatpush1.msra.mxu0 0.0
    %138 = vmatprep.subr.mxu0 0.0
    %139 = vmatpush1.msra.mxu0 0.0
    %140 = vmatprep.subr.mxu0 0.0
    %141 = vmatpush1.msra.mxu0 0.0
    %142 = vmatprep.subr.mxu0 0.0
    %143 = vmatpush1.msra.mxu0 0.0
    %144 = vmatprep.subr.mxu0 0.0
    %145 = vmatpush1.msra.mxu0 0.0
    %146 = vmatprep.subr.mxu0 0.0
    %147 = vmatpush1.msra.mxu0 0.0
    %148 = vmatprep.subr.mxu0 0.0
    %149 = vmatpush1.msra.mxu0 0.0
    %150 = vmatprep.subr.mxu0 0.0
    %151 = vmatpush1.msra.mxu0 0.0
    %152 = vmatprep.subr.mxu0 0.0
    %153 = vmatpush1.msra.mxu0 0.0
    %154 = vmatprep.subr.mxu0 0.0
    %155 = vmatpush1.msra.mxu0 0.0
    %156 = vmatprep.subr.mxu0 0.0
    %157 = vmatpush1.msra.mxu0 0.0
    %158 = vmatprep.subr.mxu0 0.0
    %159 = vmatpush1.msra.mxu0 0.0
    %160 = vmatprep.subr.mxu0 0.0
    %161 = vmatpush1.msra.mxu0 0.0
    %162 = vmatprep.subr.mxu0 0.0
    %163 = vmatpush1.msra.mxu0 0.0
    %164 = vmatprep.subr.mxu0 0.0
    %165 = vmatpush1.msra.mxu0 0.0
    %166 = vmatprep.mubr.f32.mxu0 0.0
    %167 = vmatmul.mubr.f32.gmra.mrb[0].mxu0 %v97
    %v168 = vpop.f32.mrb[0].mxu0
    %v169 = vadd.f32 0.0, %v168
    %v170 = vpop.f32.mrb[0].mxu0
    %171 = vmatprep.mubr.f32.mxu0 0.0
    %172 = vmatmul.mubr.f32.gmra.mrb[0].mxu0 %v100
    %v173 = vpop.f32.mrb[0].mxu0
    %v174 = vadd.f32 0.0, %v173
    %v175 = vpop.f32.mrb[0].mxu0
    %176 = vdwg.mxu0
    %v177 = vadd.f32 %v87, %v169
    %v178 = vadd.f32 %v88, %v174
    %179 = vst.msk [vmem:[#allocation2] sm:$0xff] %vm95, %v177
    %180 = vst.msk [vmem:[#allocation2 + $0x8] sm:$0xff] %vm95, %v178
    %s181 = scalar_lea.vmem [#allocation2], 16
    %v182 = vld [vmem:[%s181] sm:$0xff]
    %v183 = vld [vmem:[%s181 + $0x8] sm:$0xff]
    %v184 = vld [vmem:[#allocation6] sm:$0xff]
    %v185 = vld [vmem:[#allocation6 + $0x8] sm:$0xff]
    %s186 = scalar_lea.vmem [#allocation9], 32
    %v187 = vld [vmem:[%s186] sm:$0xff]
    %v188 = vld [vmem:[%s186 + $0x8] sm:$0xff]
    %v189 = vld [vmem:[%s186 + $0x10] sm:$0xff]
    %v190 = vld [vmem:[%s186 + $0x18] sm:$0xff]
    %v192 = vsel %vm95, %v184, 0
    %v195 = vsel %vm95, %v185, 0
    %197 = vmatprep.subr.mxu0 0.0
    %198 = vmatpush1.msra.mxu0 %v187
    %199 = vmatprep.subr.mxu0 0.0
    %200 = vmatpush1.msra.mxu0 %v188
    %201 = vmatprep.subr.mxu0 0.0
    %202 = vmatpush1.msra.mxu0 %v189
    %203 = vmatprep.subr.mxu0 0.0
    %204 = vmatpush1.msra.mxu0 %v190
    %205 = vmatprep.subr.mxu0 0.0
    %206 = vmatpush1.msra.mxu0 0.0
    %207 = vmatprep.subr.mxu0 0.0
    %208 = vmatpush1.msra.mxu0 0.0
    %209 = vmatprep.subr.mxu0 0.0
    %210 = vmatpush1.msra.mxu0 0.0
    %211 = vmatprep.subr.mxu0 0.0
    %212 = vmatpush1.msra.mxu0 0.0
    %213 = vmatprep.subr.mxu0 0.0
    %214 = vmatpush1.msra.mxu0 0.0
    %215 = vmatprep.subr.mxu0 0.0
    %216 = vmatpush1.msra.mxu0 0.0
    %217 = vmatprep.subr.mxu0 0.0
    %218 = vmatpush1.msra.mxu0 0.0
    %219 = vmatprep.subr.mxu0 0.0
    %220 = vmatpush1.msra.mxu0 0.0
    %221 = vmatprep.subr.mxu0 0.0
    %222 = vmatpush1.msra.mxu0 0.0
    %223 = vmatprep.subr.mxu0 0.0
    %224 = vmatpush1.msra.mxu0 0.0
    %225 = vmatprep.subr.mxu0 0.0
    %226 = vmatpush1.msra.mxu0 0.0
    %227 = vmatprep.subr.mxu0 0.0
    %228 = vmatpush1.msra.mxu0 0.0
    %229 = vmatprep.subr.mxu0 0.0
    %230 = vmatpush1.msra.mxu0 0.0
    %231 = vmatprep.subr.mxu0 0.0
    %232 = vmatpush1.msra.mxu0 0.0
    %233 = vmatprep.subr.mxu0 0.0
    %234 = vmatpush1.msra.mxu0 0.0
    %235 = vmatprep.subr.mxu0 0.0
    %236 = vmatpush1.msra.mxu0 0.0
    %237 = vmatprep.subr.mxu0 0.0
    %238 = vmatpush1.msra.mxu0 0.0
    %239 = vmatprep.subr.mxu0 0.0
    %240 = vmatpush1.msra.mxu0 0.0
    %241 = vmatprep.subr.mxu0 0.0
    %242 = vmatpush1.msra.mxu0 0.0
    %243 = vmatprep.subr.mxu0 0.0
    %244 = vmatpush1.msra.mxu0 0.0
    %245 = vmatprep.subr.mxu0 0.0
    %246 = vmatpush1.msra.mxu0 0.0
    %247 = vmatprep.subr.mxu0 0.0
    %248 = vmatpush1.msra.mxu0 0.0
    %249 = vmatprep.subr.mxu0 0.0
    %250 = vmatpush1.msra.mxu0 0.0
    %251 = vmatprep.subr.mxu0 0.0
    %252 = vmatpush1.msra.mxu0 0.0
    %253 = vmatprep.subr.mxu0 0.0
    %254 = vmatpush1.msra.mxu0 0.0
    %255 = vmatprep.subr.mxu0 0.0
    %256 = vmatpush1.msra.mxu0 0.0
    %257 = vmatprep.subr.mxu0 0.0
    %258 = vmatpush1.msra.mxu0 0.0
    %259 = vmatprep.subr.mxu0 0.0
    %260 = vmatpush1.msra.mxu0 0.0
    %261 = vmatprep.mubr.f32.mxu0 0.0
    %262 = vmatmul.mubr.f32.gmra.mrb[0].mxu0 %v192
    %v263 = vpop.f32.mrb[0].mxu0
    %v264 = vadd.f32 0.0, %v263
    %v265 = vpop.f32.mrb[0].mxu0
    %266 = vmatprep.mubr.f32.mxu0 0.0
    %267 = vmatmul.mubr.f32.gmra.mrb[0].mxu0 %v195
    %v268 = vpop.f32.mrb[0].mxu0
    %v269 = vadd.f32 0.0, %v268
    %v270 = vpop.f32.mrb[0].mxu0
    %271 = vdwg.mxu0
    %v272 = vadd.f32 %v182, %v264
    %v273 = vadd.f32 %v183, %v269
    %274 = vst.msk [vmem:[%s181] sm:$0xff] %vm95, %v272
    %275 = vst.msk [vmem:[%s181 + $0x8] sm:$0xff] %vm95, %v273
    %s276 = scalar_lea.vmem [#allocation2], 32
    %v277 = vld [vmem:[%s276] sm:$0xff]
    %v278 = vld [vmem:[%s276 + $0x8] sm:$0xff]
    %v279 = vld [vmem:[#allocation8] sm:$0xff]
    %v280 = vld [vmem:[#allocation8 + $0x8] sm:$0xff]
    %s281 = scalar_lea.vmem [#allocation9], 64
    %v282 = vld [vmem:[%s281] sm:$0xff]
    %v283 = vld [vmem:[%s281 + $0x8] sm:$0xff]
    %v284 = vld [vmem:[%s281 + $0x10] sm:$0xff]
    %v285 = vld [vmem:[%s281 + $0x18] sm:$0xff]
    %v287 = vsel %vm95, %v279, 0
    %v290 = vsel %vm95, %v280, 0
    %292 = vmatprep.subr.mxu0 0.0
    %293 = vmatpush1.msra.mxu0 %v282
    %294 = vmatprep.subr.mxu0 0.0
    %295 = vmatpush1.msra.mxu0 %v283
    %296 = vmatprep.subr.mxu0 0.0
    %297 = vmatpush1.msra.mxu0 %v284
    %298 = vmatprep.subr.mxu0 0.0
    %299 = vmatpush1.msra.mxu0 %v285
    %300 = vmatprep.subr.mxu0 0.0
    %301 = vmatpush1.msra.mxu0 0.0
    %302 = vmatprep.subr.mxu0 0.0
    %303 = vmatpush1.msra.mxu0 0.0
    %304 = vmatprep.subr.mxu0 0.0
    %305 = vmatpush1.msra.mxu0 0.0
    %306 = vmatprep.subr.mxu0 0.0
    %307 = vmatpush1.msra.mxu0 0.0
    %308 = vmatprep.subr.mxu0 0.0
    %309 = vmatpush1.msra.mxu0 0.0
    %310 = vmatprep.subr.mxu0 0.0
    %311 = vmatpush1.msra.mxu0 0.0
    %312 = vmatprep.subr.mxu0 0.0
    %313 = vmatpush1.msra.mxu0 0.0
    %314 = vmatprep.subr.mxu0 0.0
    %315 = vmatpush1.msra.mxu0 0.0
    %316 = vmatprep.subr.mxu0 0.0
    %317 = vmatpush1.msra.mxu0 0.0
    %318 = vmatprep.subr.mxu0 0.0
    %319 = vmatpush1.msra.mxu0 0.0
    %320 = vmatprep.subr.mxu0 0.0
    %321 = vmatpush1.msra.mxu0 0.0
    %322 = vmatprep.subr.mxu0 0.0
    %323 = vmatpush1.msra.mxu0 0.0
    %324 = vmatprep.subr.mxu0 0.0
    %325 = vmatpush1.msra.mxu0 0.0
    %326 = vmatprep.subr.mxu0 0.0
    %327 = vmatpush1.msra.mxu0 0.0
    %328 = vmatprep.subr.mxu0 0.0
    %329 = vmatpush1.msra.mxu0 0.0
    %330 = vmatprep.subr.mxu0 0.0
    %331 = vmatpush1.msra.mxu0 0.0
    %332 = vmatprep.subr.mxu0 0.0
    %333 = vmatpush1.msra.mxu0 0.0
    %334 = vmatprep.subr.mxu0 0.0
    %335 = vmatpush1.msra.mxu0 0.0
    %336 = vmatprep.subr.mxu0 0.0
    %337 = vmatpush1.msra.mxu0 0.0
    %338 = vmatprep.subr.mxu0 0.0
    %339 = vmatpush1.msra.mxu0 0.0
    %340 = vmatprep.subr.mxu0 0.0
    %341 = vmatpush1.msra.mxu0 0.0
    %342 = vmatprep.subr.mxu0 0.0
    %343 = vmatpush1.msra.mxu0 0.0
    %344 = vmatprep.subr.mxu0 0.0
    %345 = vmatpush1.msra.mxu0 0.0
    %346 = vmatprep.subr.mxu0 0.0
    %347 = vmatpush1.msra.mxu0 0.0
    %348 = vmatprep.subr.mxu0 0.0
    %349 = vmatpush1.msra.mxu0 0.0
    %350 = vmatprep.subr.mxu0 0.0
    %351 = vmatpush1.msra.mxu0 0.0
    %352 = vmatprep.subr.mxu0 0.0
    %353 = vmatpush1.msra.mxu0 0.0
    %354 = vmatprep.subr.mxu0 0.0
    %355 = vmatpush1.msra.mxu0 0.0
    %356 = vmatprep.mubr.f32.mxu0 0.0
    %357 = vmatmul.mubr.f32.gmra.mrb[0].mxu0 %v287
    %v358 = vpop.f32.mrb[0].mxu0
    %v359 = vadd.f32 0.0, %v358
    %v360 = vpop.f32.mrb[0].mxu0
    %361 = vmatprep.mubr.f32.mxu0 0.0
    %362 = vmatmul.mubr.f32.gmra.mrb[0].mxu0 %v290
    %v363 = vpop.f32.mrb[0].mxu0
    %v364 = vadd.f32 0.0, %v363
    %v365 = vpop.f32.mrb[0].mxu0
    %366 = vdwg.mxu0
    %v367 = vadd.f32 %v277, %v359
    %v368 = vadd.f32 %v278, %v364
    %369 = vst.msk [vmem:[%s276] sm:$0xff] %vm95, %v367
    %370 = vst.msk [vmem:[%s276 + $0x8] sm:$0xff] %vm95, %v368
    // Predicated region
    $region42: #{tpu_custom_call.1} parent=1 // pred_check
      %p371 = pneg %p76
    $region43: #{tpu_custom_call.1} parent=1 // pred_check_branch
      %373 = sbr.rel (%p371) target = $region45
    $region44: #{tpu_custom_call.1} parent=1 // pred_region
      %v374 = vld [vmem:[#allocation2] sm:$0xff]
      %v375 = vld [vmem:[#allocation2 + $0x8] sm:$0xff]
      %v376 = vld [vmem:[#allocation2 + $0x10] sm:$0xff]
      %v377 = vld [vmem:[#allocation2 + $0x18] sm:$0xff]
      %v378 = vld [vmem:[#allocation2 + $0x20] sm:$0xff]
      %v379 = vld [vmem:[#allocation2 + $0x28] sm:$0xff]
      %v380 = vld [vmem:[%s4] sm:$0x1]
      %v381 = vld [vmem:[%s4 + $0x1] sm:$0x1]
      %v382 = vld [vmem:[%s4 + $0x2] sm:$0x1]
      %v386 = vlaneseq
      %v387 = vshrl.u32 %v386, 7
      %v388 = vsub.s32 0, %v387
      %v389 = vrot.slane %v380, %v388
      %v390 = vlaneseq
      %v391 = vshrl.u32 %v390, 7
      %v392 = vsub.s32 0, %v391
      %v393 = vrot.slane %v381, %v392
      %v394 = vlaneseq
      %v395 = vshrl.u32 %v394, 7
      %v396 = vsub.s32 0, %v395
      %v397 = vrot.slane %v382, %v396
      %v401 = vadd.f32 %v374, %v389
      %v402 = vadd.f32 %v375, %v389
      %v403 = vadd.f32 %v376, %v393
      %v404 = vadd.f32 %v377, %v393
      %v405 = vadd.f32 %v378, %v397
      %v406 = vadd.f32 %v379, %v397
      %407 = vst.msk [vmem:[#allocation11] sm:$0xff] %vm95, %v401
      %408 = vst.msk [vmem:[#allocation11 + $0x8] sm:$0xff] %vm95, %v402
      %409 = vst.msk [vmem:[#allocation11 + $0x10] sm:$0xff] %vm95, %v403
      %410 = vst.msk [vmem:[#allocation11 + $0x18] sm:$0xff] %vm95, %v404
      %411 = vst.msk [vmem:[#allocation11 + $0x20] sm:$0xff] %vm95, %v405
      %412 = vst.msk [vmem:[#allocation11 + $0x28] sm:$0xff] %vm95, %v406
    $region45: #{tpu_custom_call.1} parent=1 // pred_fallthru
      _
    // Predicated region
    $region46: #{tpu_custom_call.1} parent=1 // pred_check
      _
    $region47: #{tpu_custom_call.1} parent=1 // pred_check_branch
      %414 = sbr.rel (0) target = $region49
    $region48: #{tpu_custom_call.1} parent=1 // pred_region
      %s416 = ssub.s32 768, 768
      %417 = vsyncadd [#allocation5], %s416
      %s418 = sshll.u32 [#allocation11], 4
      %s419 = int_to_ptr.vmem [resolvable:$true] %s418
      %424 = dma.vmem_to_hbm [thread:$0]  %s419, 768, %s5, [#allocation5], 128, 128, 8
    $region49: #{tpu_custom_call.1} parent=1 // pred_fallthru
      _
    // Predicated region
    $region50: #{tpu_custom_call.1} parent=1 // pred_check
      _
    $region51: #{tpu_custom_call.1} parent=1 // pred_check_branch
      %426 = sbr.rel (0) target = $region53
    $region52: #{tpu_custom_call.1} parent=1 // pred_region
      %427 = dma.done [#allocation5], 768
    $region53: #{tpu_custom_call.1} parent=1 // pred_fallthru
      _
    %428 = vsyncpa [#allocation4], 1
    %429 = vsyncpa [#allocation7], 1
    %430 = vsyncpa [#allocation10], 1
    %431 = vsyncpa [#allocation5], 1

</llo_original>
